<compile_context>
chip_gen: v5e
topology: v5e:2x2
jax: 0.10.0
libtpu: 0.0.40
codegen_flags: <defaults>
</compile_context>

<pallas_src>
import jax
import jax.numpy as jnp
from jax.experimental import pallas as pl
from jax.experimental.pallas import tpu as pltpu

LANES = 128
_SPLIT_MIN_ROWS = 1024          # per-tile rows below which a 2-way split is not worth it
_MAX_BLOCK_ROWS = 8192          # VMEM-safe cap (v7x: 64 MiB physical, v5e: 16 MiB scoped default)


def _round_up(n, m):
    return ((n + m - 1) // m) * m


def _linear1to2_interleaved_kernel(x_ref, spread_ref, wpat_ref, bpat_ref, o_ref):
    # x_ref:      (TR, 128)  f32 VMEM -- 128 batch elements per row, lane-dense.
    # spread_ref: (128, 256) f32 VMEM -- 0/1 spread matrix, S[k, 2k] = S[k, 2k+1] = 1.
    # wpat_ref:   (1, 256)   f32 VMEM -- [w0, w1, w0, w1, ...]
    # bpat_ref:   (1, 256)   f32 VMEM -- [b0, b1, b0, b1, ...]
    # o_ref:      (TR, 256)  VMEM     -- feature-interleaved, lane-dense output.
    #
    # xe[r, 2c] = xe[r, 2c+1] = x[r, c]  (pure lane-duplication via MXU, exact: S is 0/1).
    xe = jnp.dot(x_ref[...], spread_ref[...], preferred_element_type=jnp.float32)
    # Linear(1, 2) itself stays on the VPU in f32.
    o_ref[...] = (xe * wpat_ref[...] + bpat_ref[...]).astype(o_ref.dtype)


def table_of_2_forward(obs, weight, bias, *, block_rows=4096,
                       min_batch_for_pallas=16384, force_pallas=False,
                       out_dtype=None):
    """Forward of torch.nn.Linear(1, 2).

    obs: (B, 1); weight: (2, 1) (PyTorch layout); bias: (2,).
    Returns (B, 2) == obs @ weight.T + bias.
    """
    if out_dtype is None:
        out_dtype = jnp.float32
    B = obs.shape[0]

    w_flat = weight.reshape(2).astype(jnp.float32)   # in_features == 1
    b_flat = bias.reshape(2).astype(jnp.float32)
    x_flat = obs.reshape(B).astype(jnp.float32)

    # --- small-batch fallback: let XLA fuse the 2-flop/row op (review item) ---
    if B < min_batch_for_pallas and not force_pallas:
        y = x_flat[:, None] * w_flat[None, :] + b_flat[None, :]
        return y.astype(out_dtype)

    # --- lane-dense input view: (R, 128); pad only to the next 128 boundary ---
    R = pl.cdiv(B, LANES)
    B_row = R * LANES
    if B_row != B:
        # Unavoidable copy only when B is not 128-aligned (tail sliced off below).
        x_flat = jnp.pad(x_flat, (0, B_row - B))
    x2d = x_flat.reshape(R, LANES)

    # --- tile-size selection (review items: bigger tiles, v7x 2-TC split) ---
    block_rows = max(8, (int(block_rows) // 8) * 8)
    block_rows = min(block_rows, _MAX_BLOCK_ROWS)
    TR = min(block_rows, _round_up(R, 8))
    if R >= 2 * _SPLIT_MIN_ROWS:
        # Guarantee >= 2 grid steps so ("parallel",) can use both v7x TensorCores.
        TR = min(TR, _round_up(pl.cdiv(R, 2), 8))
    num_tiles = pl.cdiv(R, TR)

    # --- tiny constants: spread matrix + interleaved weight/bias lane patterns ---
    lane = jnp.arange(2 * LANES, dtype=jnp.int32)                       # (256,)
    parity = lane % 2
    wpat = jnp.where(parity == 0, w_flat[0], w_flat[1]).reshape(1, 2 * LANES)
    bpat = jnp.where(parity == 0, b_flat[0], b_flat[1]).reshape(1, 2 * LANES)
    spread = (lane[None, :] // 2 ==
              jnp.arange(LANES, dtype=jnp.int32)[:, None]).astype(jnp.float32)  # (128, 256)

    # --- VMEM budget: double-buffered input + output blocks, plus headroom ---
    out_itemsize = jnp.dtype(out_dtype).itemsize
    block_bytes = TR * LANES * 4 + TR * 2 * LANES * out_itemsize
    vmem_limit = int(min(max(2 * block_bytes + (2 << 20), 16 << 20), 56 << 20))

    out = pl.pallas_call(
        _linear1to2_interleaved_kernel,
        out_shape=jax.ShapeDtypeStruct((R, 2 * LANES), out_dtype),
        grid=(num_tiles,),
        in_specs=[
            pl.BlockSpec((TR, LANES), lambda i: (i, 0)),
            pl.BlockSpec((LANES, 2 * LANES), lambda i: (0, 0)),
            pl.BlockSpec((1, 2 * LANES), lambda i: (0, 0)),
            pl.BlockSpec((1, 2 * LANES), lambda i: (0, 0)),
        ],
        out_specs=pl.BlockSpec((TR, 2 * LANES), lambda i: (i, 0)),
        compiler_params=pltpu.CompilerParams(
            dimension_semantics=("parallel",),
            vmem_limit_bytes=vmem_limit,
        ),
    )(x2d, spread, wpat, bpat)

    # Free contiguous reshape (no transpose); slice drops padded tail rows only.
    out_flat = out.reshape(R * LANES, 2)
    return out_flat if B == R * LANES else out_flat[:B]


if __name__ == "__main__":
    key = jax.random.PRNGKey(0)
    k_obs, k_w, k_b = jax.random.split(key, 3)

    weight = jax.random.uniform(k_w, (2, 1), minval=-1.0, maxval=1.0, dtype=jnp.float32)
    bias = jax.random.uniform(k_b, (2,), minval=-1.0, maxval=1.0, dtype=jnp.float32)

    # 1) Small, non-128-aligned batch; kernel forced (ragged final block + tail slice).
    B1 = 300
    obs1 = jax.random.normal(k_obs, (B1, 1), dtype=jnp.float32)
    out1 = table_of_2_forward(obs1, weight, bias, force_pallas=True)
    jax.block_until_ready(out1)
    ref1 = obs1 @ weight.T + bias
    assert out1.shape == (B1, 2)
    assert jnp.allclose(out1, ref1, atol=1e-5, rtol=1e-5)

    # 2) 128-aligned batch, multi-tile "parallel" grid (4 grid steps), no pad copy.
    B2 = 4096
    obs2 = jax.random.normal(jax.random.PRNGKey(1), (B2, 1), dtype=jnp.float32)
    out2 = table_of_2_forward(obs2, weight, bias, block_rows=8, force_pallas=True)
    jax.block_until_ready(out2)
    ref2 = obs2 @ weight.T + bias
    assert out2.shape == (B2, 2)
    assert jnp.allclose(out2, ref2, atol=1e-5, rtol=1e-5)

    # 3) Default small-batch fallback path (plain JAX, no pallas_call).
    out3 = table_of_2_forward(obs1, weight, bias)
    jax.block_until_ready(out3)
    assert jnp.allclose(out3, ref1, atol=1e-6)

    print("KERNEL_OK")
</pallas_src>

<mosaic_0001>
module attributes {stable_mosaic.version = 11 : i64} {
  func.func @_linear1to2_interleaved_kernel(%arg0: i32, %arg1: memref<8x128xf32, #tpu.memory_space<vmem>>, %arg2: memref<128x256xf32, #tpu.memory_space<vmem>>, %arg3: memref<1x256xf32, #tpu.memory_space<vmem>>, %arg4: memref<1x256xf32, #tpu.memory_space<vmem>>, %arg5: memref<8x256xf32, #tpu.memory_space<vmem>>) attributes {dimension_semantics = [#tpu.dimension_semantics<parallel>], iteration_bounds = array<i64: 1>, scalar_prefetch = 0 : i64, scratch_operands = 0 : i64, tpu.core_type = #tpu.core_type<tc>, window_params = [{transform_indices = @transform_0, window_bounds = array<i64: 8, 128>}, {pipeline_mode = #tpu.pipeline_mode<synchronous>, transform_indices = @transform_1, window_bounds = array<i64: 128, 256>}, {pipeline_mode = #tpu.pipeline_mode<synchronous>, transform_indices = @transform_2, window_bounds = array<i64: 1, 256>}, {pipeline_mode = #tpu.pipeline_mode<synchronous>, transform_indices = @transform_3, window_bounds = array<i64: 1, 256>}, {transform_indices = @transform_4, window_bounds = array<i64: 8, 256>}]} {
    %c0 = arith.constant 0 : index
    %c0_0 = arith.constant 0 : index
    %0 = vector.load %arg1[%c0, %c0_0] : memref<8x128xf32, #tpu.memory_space<vmem>>, vector<8x128xf32>
    %c0_1 = arith.constant 0 : index
    %c0_2 = arith.constant 0 : index
    %1 = vector.load %arg2[%c0_1, %c0_2] : memref<128x256xf32, #tpu.memory_space<vmem>>, vector<128x256xf32>
    %cst = arith.constant dense<0.000000e+00> : vector<8x256xf32>
    %2 = tpu.matmul %0, %1, %cst {dimension_numbers = #tpu.dot_dimension_numbers<[1], [0], [0], [1], [0, 0, 1, 1], [], []>} : vector<8x128xf32>, vector<128x256xf32>, vector<8x256xf32> -> vector<8x256xf32>
    %c0_3 = arith.constant 0 : index
    %c0_4 = arith.constant 0 : index
    %3 = vector.load %arg3[%c0_3, %c0_4] : memref<1x256xf32, #tpu.memory_space<vmem>>, vector<1x256xf32>
    %4 = vector.broadcast %3 : vector<1x256xf32> to vector<8x256xf32>
    %5 = arith.mulf %2, %4 : vector<8x256xf32>
    %c0_5 = arith.constant 0 : index
    %c0_6 = arith.constant 0 : index
    %6 = vector.load %arg4[%c0_5, %c0_6] : memref<1x256xf32, #tpu.memory_space<vmem>>, vector<1x256xf32>
    %7 = vector.broadcast %6 : vector<1x256xf32> to vector<8x256xf32>
    %8 = arith.addf %5, %7 : vector<8x256xf32>
    %c0_7 = arith.constant 0 : index
    %c0_8 = arith.constant 0 : index
    %9 = vector.load %arg5[%c0_7, %c0_8] : memref<8x256xf32, #tpu.memory_space<vmem>>, vector<8x256xf32>
    tpu.vector_store %arg5[%c0_7, %c0_8], %8 {strides = array<i32>} : memref<8x256xf32, #tpu.memory_space<vmem>>, vector<8x256xf32>,
    return
  }
  func.func @transform_0(%arg0: i32) -> (i32, i32) {
    %c0_i32 = arith.constant 0 : i32
    %c0_i32_0 = arith.constant 0 : i32
    return %arg0, %c0_i32 : i32, i32
  }
  func.func @transform_1(%arg0: i32) -> (i32, i32) {
    %c0_i32 = arith.constant 0 : i32
    %c0_i32_0 = arith.constant 0 : i32
    %c0_i32_1 = arith.constant 0 : i32
    return %c0_i32, %c0_i32_0 : i32, i32
  }
  func.func @transform_2(%arg0: i32) -> (i32, i32) {
    %c0_i32 = arith.constant 0 : i32
    %c0_i32_0 = arith.constant 0 : i32
    %c0_i32_1 = arith.constant 0 : i32
    return %c0_i32, %c0_i32_0 : i32, i32
  }
  func.func @transform_3(%arg0: i32) -> (i32, i32) {
    %c0_i32 = arith.constant 0 : i32
    %c0_i32_0 = arith.constant 0 : i32
    %c0_i32_1 = arith.constant 0 : i32
    return %c0_i32, %c0_i32_0 : i32, i32
  }
  func.func @transform_4(%arg0: i32) -> (i32, i32) {
    %c0_i32 = arith.constant 0 : i32
    %c0_i32_0 = arith.constant 0 : i32
    return %arg0, %c0_i32 : i32, i32
  }
}

</mosaic_0001>

<llo_original>
// kernel: tpu_custom_call.1
$region0: #{tpu_custom_call.1}
  #allocation0 [shape = 'u32[]', space=smem, size = 0x4, offset = 0x4, fixed_abs, tag = 'smem constant byte address 0x4 - core index']
  #allocation1 [shape = 'u32[72,128]{1,0:T(1,128)}', space=vmem, size = 0x9000, scoped, tag = 'internal scratch']
  %s0 = inlined_call_operand.hbm [shape: f32[3,128], index: 0, kind: input, shape index: {}]
  %s1 = inlined_call_operand.hbm [shape: f32[128,256], index: 1, kind: input, shape index: {}]
  %s2 = inlined_call_operand.hbm [shape: f32[1,256], index: 2, kind: input, shape index: {}]
  %s3 = inlined_call_operand.vmem [shape: f32[1,256], index: 3, kind: input, shape index: {}]
  %s4 = inlined_call_operand.hbm [shape: f32[3,256], index: 4, kind: output, shape index: {}]
  %s5 = sld [smem:[#allocation0]]
  $region38: #{tpu_custom_call.1} parent=0
    _
  %s7 = ssub.s32 1, %s5
  %s8 = scalar_select 0, %s7, %s5
  $region1: #{tpu_custom_call.1} parent=0
    #allocation2 [shape = 'u8[4096]{0}', space=vmem, size = 0x1000, scoped, tag = 'input window, operand 0, single buffered']
    #allocation3 [shape = 's32[1]{0}', space=sflag, size = 0x4, scoped, tag = 'scoped memory for tpu_custom_call.1']
    #allocation4 [shape = 's32[1]{0}', space=sflag, size = 0x4, scoped, tag = 'scoped memory for tpu_custom_call.1']
    #allocation5 [shape = 'u8[131072]{0}', space=vmem, size = 0x20000, scoped, tag = 'input window, operand 1, single buffered']
    #allocation6 [shape = 's32[1]{0}', space=sflag, size = 0x4, scoped, tag = 'scoped memory for tpu_custom_call.1']
    #allocation7 [shape = 'u8[1024]{0}', space=vmem, size = 0x400, scoped, tag = 'input window, operand 2, single buffered']
    #allocation8 [shape = 'u8[8192]{0}', space=vmem, size = 0x2000, scoped, tag = 'output window, operand 0, single buffered']
    %9 = vsyncpa [#allocation3], 0
    %10 = vsyncpa [#allocation6], 0
    %11 = vsyncpa [#allocation4], 0
    // Predicated region
    $region2: #{tpu_custom_call.1} parent=1 // pred_check
      _
    $region3: #{tpu_custom_call.1} parent=1 // pred_check_branch
      %13 = sbr.rel (0) target = $region5
    $region4: #{tpu_custom_call.1} parent=1 // pred_region
      %15 = vsyncadd [#allocation3], 64
      %s16 = sshll.u32 %s0, 4
      %s17 = int_to_ptr.hbm [resolvable:$true] %s16
      %s18 = sshll.u32 [#allocation2], 4
      %s19 = int_to_ptr.vmem [resolvable:$true] %s18
      %24 = dma.hbm_to_vmem [thread:$0]  %s17, 64, %s19, [#allocation3], 64, 64, 4
    $region5: #{tpu_custom_call.1} parent=1 // pred_fallthru
      _
    // Predicated region
    $region6: #{tpu_custom_call.1} parent=1 // pred_check
      _
    $region7: #{tpu_custom_call.1} parent=1 // pred_check_branch
      %26 = sbr.rel (0) target = $region9
    $region8: #{tpu_custom_call.1} parent=1 // pred_region
      %28 = vsyncadd [#allocation6], 0
      %s29 = sshll.u32 %s1, 4
      %s30 = int_to_ptr.hbm [resolvable:$true] %s29
      %s31 = sshll.u32 [#allocation5], 4
      %s32 = int_to_ptr.vmem [resolvable:$true] %s31
      %37 = dma.hbm_to_vmem [thread:$0]  %s30, 4096, %s32, [#allocation6], 256, 256, 16
    $region9: #{tpu_custom_call.1} parent=1 // pred_fallthru
      _
    // Predicated region
    $region10: #{tpu_custom_call.1} parent=1 // pred_check
      _
    $region11: #{tpu_custom_call.1} parent=1 // pred_check_branch
      %39 = sbr.rel (0) target = $region13
    $region12: #{tpu_custom_call.1} parent=1 // pred_region
      %41 = vsyncadd [#allocation6], 0
      %s43 = sshll.u32 %s2, 4
      %s44 = int_to_ptr.hbm [resolvable:$true] %s43
      %s45 = sshll.u32 [#allocation7], 4
      %s46 = int_to_ptr.vmem [resolvable:$true] %s45
      %48 = dma.hbm_to_vmem [thread:$0]  %s44, 32, %s46, [#allocation6]
    $region13: #{tpu_custom_call.1} parent=1 // pred_fallthru
      _
    // Predicated region
    $region14: #{tpu_custom_call.1} parent=1 // pred_check
      _
    $region15: #{tpu_custom_call.1} parent=1 // pred_check_branch
      %50 = sbr.rel (0) target = $region17
    $region16: #{tpu_custom_call.1} parent=1 // pred_region
      _
    $region17: #{tpu_custom_call.1} parent=1 // pred_fallthru
      _
    // Predicated region
    $region18: #{tpu_custom_call.1} parent=1 // pred_check
      _
    $region19: #{tpu_custom_call.1} parent=1 // pred_check_branch
      %52 = sbr.rel (0) target = $region21
    $region20: #{tpu_custom_call.1} parent=1 // pred_region
      %54 = dma.done [#allocation3], 128
    $region21: #{tpu_custom_call.1} parent=1 // pred_fallthru
      _
    // Predicated region
    $region22: #{tpu_custom_call.1} parent=1 // pred_check
      _
    $region23: #{tpu_custom_call.1} parent=1 // pred_check_branch
      %56 = sbr.rel (0) target = $region25
    $region24: #{tpu_custom_call.1} parent=1 // pred_region
      %58 = dma.done [#allocation6], 4096
    $region25: #{tpu_custom_call.1} parent=1 // pred_fallthru
      _
    // Predicated region
    $region26: #{tpu_custom_call.1} parent=1 // pred_check
      _
    $region27: #{tpu_custom_call.1} parent=1 // pred_check_branch
      %60 = sbr.rel (0) target = $region29
    $region28: #{tpu_custom_call.1} parent=1 // pred_region
      %62 = dma.done [#allocation6], 32
    $region29: #{tpu_custom_call.1} parent=1 // pred_fallthru
      _
    %v63 = vld [vmem:[#allocation2] sm:$0xff]
    %v64 = vld [vmem:[#allocation5] sm:$0xff]
    %v65 = vld [vmem:[#allocation5 + $0x8] sm:$0xff]
    %v66 = vld [vmem:[#allocation5 + $0x10] sm:$0xff]
    %v67 = vld [vmem:[#allocation5 + $0x18] sm:$0xff]
    %v68 = vld [vmem:[#allocation5 + $0x20] sm:$0xff]
    %v69 = vld [vmem:[#allocation5 + $0x28] sm:$0xff]
    %v70 = vld [vmem:[#allocation5 + $0x30] sm:$0xff]
    %v71 = vld [vmem:[#allocation5 + $0x38] sm:$0xff]
    %v72 = vld [vmem:[#allocation5 + $0x40] sm:$0xff]
    %v73 = vld [vmem:[#allocation5 + $0x48] sm:$0xff]
    %v74 = vld [vmem:[#allocation5 + $0x50] sm:$0xff]
    %v75 = vld [vmem:[#allocation5 + $0x58] sm:$0xff]
    %v76 = vld [vmem:[#allocation5 + $0x60] sm:$0xff]
    %v77 = vld [vmem:[#allocation5 + $0x68] sm:$0xff]
    %v78 = vld [vmem:[#allocation5 + $0x70] sm:$0xff]
    %v79 = vld [vmem:[#allocation5 + $0x78] sm:$0xff]
    %v80 = vld [vmem:[#allocation5 + $0x80] sm:$0xff]
    %v81 = vld [vmem:[#allocation5 + $0x88] sm:$0xff]
    %v82 = vld [vmem:[#allocation5 + $0x90] sm:$0xff]
    %v83 = vld [vmem:[#allocation5 + $0x98] sm:$0xff]
    %v84 = vld [vmem:[#allocation5 + $0xa0] sm:$0xff]
    %v85 = vld [vmem:[#allocation5 + $0xa8] sm:$0xff]
    %v86 = vld [vmem:[#allocation5 + $0xb0] sm:$0xff]
    %v87 = vld [vmem:[#allocation5 + $0xb8] sm:$0xff]
    %v88 = vld [vmem:[#allocation5 + $0xc0] sm:$0xff]
    %v89 = vld [vmem:[#allocation5 + $0xc8] sm:$0xff]
    %v90 = vld [vmem:[#allocation5 + $0xd0] sm:$0xff]
    %v91 = vld [vmem:[#allocation5 + $0xd8] sm:$0xff]
    %v92 = vld [vmem:[#allocation5 + $0xe0] sm:$0xff]
    %v93 = vld [vmem:[#allocation5 + $0xe8] sm:$0xff]
    %v94 = vld [vmem:[#allocation5 + $0xf0] sm:$0xff]
    %v95 = vld [vmem:[#allocation5 + $0xf8] sm:$0xff]
    %96 = vmatpush.msra.mxu0 %v94
    %97 = vmatpush.msra.mxu0 %v92
    %98 = vmatpush.msra.mxu0 %v90
    %99 = vmatpush.msra.mxu0 %v88
    %100 = vmatpush.msra.mxu0 %v86
    %101 = vmatpush.msra.mxu0 %v84
    %102 = vmatpush.msra.mxu0 %v82
    %103 = vmatpush.msra.mxu0 %v80
    %104 = vmatpush.msra.mxu0 %v78
    %105 = vmatpush.msra.mxu0 %v76
    %106 = vmatpush.msra.mxu0 %v74
    %107 = vmatpush.msra.mxu0 %v72
    %108 = vmatpush.msra.mxu0 %v70
    %109 = vmatpush.msra.mxu0 %v68
    %110 = vmatpush.msra.mxu0 %v66
    %111 = vmatpush.msra.mxu0 %v64
    %112 = vmatmul.f32.gmra.mxu0 %v63
    %v113 = vpop.f32.mrf.mxu0
    %v114 = vadd.f32 0.0, %v113
    %115 = vdwg.mxu0
    %116 = vmatpush.msra.mxu0 %v95
    %117 = vmatpush.msra.mxu0 %v93
    %118 = vmatpush.msra.mxu0 %v91
    %119 = vmatpush.msra.mxu0 %v89
    %120 = vmatpush.msra.mxu0 %v87
    %121 = vmatpush.msra.mxu0 %v85
    %122 = vmatpush.msra.mxu0 %v83
    %123 = vmatpush.msra.mxu0 %v81
    %124 = vmatpush.msra.mxu0 %v79
    %125 = vmatpush.msra.mxu0 %v77
    %126 = vmatpush.msra.mxu0 %v75
    %127 = vmatpush.msra.mxu0 %v73
    %128 = vmatpush.msra.mxu0 %v71
    %129 = vmatpush.msra.mxu0 %v69
    %130 = vmatpush.msra.mxu0 %v67
    %131 = vmatpush.msra.mxu0 %v65
    %132 = vmatmul.f32.gmra.mxu0 %v63
    %v133 = vpop.f32.mrf.mxu0
    %v134 = vadd.f32 0.0, %v133
    %135 = vdwg.mxu0
    %v136 = vld [vmem:[#allocation7] sm:$0x3]
    %v138 = vperm.slane %v136, 0
    %v139 = vperm.slane %v136, 1
    %v142 = vmul.f32 %v114, %v138
    %v143 = vmul.f32 %v134, %v139
    %v144 = vld [vmem:[%s3] sm:$0x3]
    %v146 = vperm.slane %v144, 0
    %v147 = vperm.slane %v144, 1
    %v150 = vadd.f32 %v142, %v146
    %v151 = vadd.f32 %v143, %v147
    %v154 = vrot.slane %v151, 4
    %vm155 = vcmask 1043456
    %v156 = vsel %vm155, %v150, %v154
    %v157 = vsel %vm155, %v154, %v150
    %v158 = vrot.slane %v157, 4
    %161 = vst [vmem:[#allocation8] sm:$0xff] %v156
    %162 = vst [vmem:[#allocation8 + $0x8] sm:$0xff] %v158
    // Predicated region
    $region30: #{tpu_custom_call.1} parent=1 // pred_check
      _
    $region31: #{tpu_custom_call.1} parent=1 // pred_check_branch
      %164 = sbr.rel (0) target = $region33
    $region32: #{tpu_custom_call.1} parent=1 // pred_region
      %166 = vsyncadd [#allocation4], 128
      %s167 = sshll.u32 [#allocation8], 4
      %s168 = int_to_ptr.vmem [resolvable:$true] %s167
      %s169 = sshll.u32 %s4, 4
      %s170 = int_to_ptr.hbm [resolvable:$true] %s169
      %175 = dma.vmem_to_hbm [thread:$0]  %s168, 128, %s170, [#allocation4], 128, 128, 8
    $region33: #{tpu_custom_call.1} parent=1 // pred_fallthru
      _
    // Predicated region
    $region34: #{tpu_custom_call.1} parent=1 // pred_check
      _
    $region35: #{tpu_custom_call.1} parent=1 // pred_check_branch
      %177 = sbr.rel (0) target = $region37
    $region36: #{tpu_custom_call.1} parent=1 // pred_region
      %179 = dma.done [#allocation4], 256
    $region37: #{tpu_custom_call.1} parent=1 // pred_fallthru
      _
    %180 = vsyncpa [#allocation3], 1
    %181 = vsyncpa [#allocation6], 1
    %182 = vsyncpa [#allocation4], 1

</llo_original>
